<compile_context>
chip_gen: v7x
topology: tpu7x:2x2x1
jax: 0.10.0
libtpu: 0.0.40
codegen_flags: <defaults>
</compile_context>

<pallas_src>
import jax
import jax.numpy as jnp
from jax.experimental import pallas as pl
from jax.experimental.pallas import tpu as pltpu


def _cell_interact_kernel(expr_ref, enc_ref, transform_ref, gene_resp_ref, out_ref):
    # Block shapes: expr (Bb, N, G), enc (Bb, N, E), transform (E, E),
    # gene_response (G, G), out (Bb, N, G).  The cell axis N is never tiled,
    # so expr_ref.shape[1] == expression.shape[1] (PyTorch's divisor).
    bb, n, g = expr_ref.shape
    e = enc_ref.shape[-1]

    enc3 = enc_ref[...]                                      # (Bb, N, E)
    expr3 = expr_ref[...]                                     # (Bb, N, G)

    # ---- chain A (independent of the sigmoid chain): x = expr @ gene_response
    # Flatten the batch block into the MXU M dimension: one (Bb*N, G)x(G, G).
    x2 = jnp.dot(expr3.reshape(bb * n, g), gene_resp_ref[...],
                 preferred_element_type=jnp.float32)          # (Bb*N, G)

    # ---- chain B: cell interaction = sigmoid(enc @ T @ enc^T)
    t2 = jnp.dot(enc3.reshape(bb * n, e), transform_ref[...],
                 preferred_element_type=jnp.float32)          # (Bb*N, E)
    # Contract last dims of both operands -> no explicit transpose (no vxpose).
    s = jnp.einsum("bne,bme->bnm", t2.reshape(bb, n, e), enc3,
                   preferred_element_type=jnp.float32)        # (Bb, N, N)
    c = jax.nn.sigmoid(s)

    # ---- combine: out = C @ x, scaled by 1/N (trace-time reciprocal -> vmul)
    o = jnp.einsum("bnm,bmg->bng", c, x2.reshape(bb, n, g),
                   preferred_element_type=jnp.float32)        # (Bb, N, G)
    out_ref[...] = (o * (1.0 / n)).astype(out_ref.dtype)


def _pick_batch_block(B, N, G, E, vmem_budget_bytes=8 * 1024 * 1024):
    """Largest batch block that (a) divides B, (b) fits a conservative VMEM
    budget, and (c) leaves >= 2 grid steps when B >= 2 (v7x megacore)."""
    # Rough per-batch f32 footprint: expr + x + out, enc + t, s + c.
    per_b = 4 * (3 * N * G + 2 * N * E + 2 * N * N)
    cap = max(1, vmem_budget_bytes // max(per_b, 1))
    target = max(1, B // 2) if B >= 2 else B
    b_blk = int(min(cap, target, B))
    while B % b_blk:
        b_blk -= 1
    return b_blk


def cell_interact(expression, encoding, transform, gene_response):
    """expression: (B, N, G) f32; encoding: (B, N, E) f32;
       transform: (E, E) f32; gene_response: (G, G) f32  ->  (B, N, G) f32"""
    B, N, G = expression.shape
    _, _, E = encoding.shape

    b_blk = _pick_batch_block(B, N, G, E)
    grid_b = B // b_blk

    flops = B * (2 * N * E * E + 2 * N * N * E + 2 * N * G * G + 2 * N * N * G)
    bytes_accessed = 4 * (2 * B * N * G + B * N * E + E * E + G * G)

    return pl.pallas_call(
        _cell_interact_kernel,
        out_shape=jax.ShapeDtypeStruct((B, N, G), expression.dtype),
        grid_spec=pltpu.PrefetchScalarGridSpec(
            num_scalar_prefetch=0,
            grid=(grid_b,),
            in_specs=[
                pl.BlockSpec((b_blk, N, G), lambda b: (b, 0, 0)),   # expression
                pl.BlockSpec((b_blk, N, E), lambda b: (b, 0, 0)),   # encoding
                pl.BlockSpec((E, E), lambda b: (0, 0)),              # transform
                pl.BlockSpec((G, G), lambda b: (0, 0)),              # gene_response
            ],
            out_specs=pl.BlockSpec((b_blk, N, G), lambda b: (b, 0, 0)),
        ),
        compiler_params=pltpu.CompilerParams(
            dimension_semantics=("parallel",),
        ),
        cost_estimate=pl.CostEstimate(
            flops=flops,
            transcendentals=B * N * N,
            bytes_accessed=bytes_accessed,
        ),
    )(expression, encoding, transform, gene_response)


def _reference(expression, encoding, transform, gene_response):
    c = jax.nn.sigmoid(
        jnp.einsum("bne,ef,bmf->bnm", encoding, transform, encoding)
    )
    out = jnp.einsum("bnm,bmg,gh->bnh", c, expression, gene_response)
    return out / expression.shape[1]


if __name__ == "__main__":
    # Small deterministic setup consistent with the module:
    #   d_gene = 16, d_embed = 32, n_cells = 8, batch = 4
    # (batch=4 -> b_blk=2, grid=(2,): exercises the batched/flattened-M path
    #  while keeping two parallel grid steps.)
    d_gene, d_embed, n_cells, batch = 16, 32, 8, 4

    key = jax.random.PRNGKey(0)
    k1, k2, k3, k4 = jax.random.split(key, 4)

    # Parameters (torch.randn equivalents), deterministic in-script.
    transform = jax.random.normal(k1, (d_embed, d_embed), dtype=jnp.float32)
    gene_response = jax.random.normal(k2, (d_gene, d_gene), dtype=jnp.float32)

    # Inputs.
    expression = jax.random.normal(k3, (batch, n_cells, d_gene), dtype=jnp.float32)
    encoding = jax.random.normal(k4, (batch, n_cells, d_embed), dtype=jnp.float32)

    out = cell_interact(expression, encoding, transform, gene_response)
    out = jax.block_until_ready(out)

    ref = _reference(expression, encoding, transform, gene_response)
    assert out.shape == (batch, n_cells, d_gene)
    assert jnp.allclose(out, ref, atol=1e-4, rtol=1e-4), "mismatch vs reference"

    print("KERNEL_OK")
</pallas_src>

<mosaic_0001>
module attributes {stable_mosaic.version = 11 : i64} {
  func.func @_cell_interact_kernel(%arg0: i32, %arg1: memref<2x8x16xf32, #tpu.memory_space<vmem>>, %arg2: memref<2x8x32xf32, #tpu.memory_space<vmem>>, %arg3: memref<32x32xf32, #tpu.memory_space<vmem>>, %arg4: memref<16x16xf32, #tpu.memory_space<vmem>>, %arg5: memref<2x8x16xf32, #tpu.memory_space<vmem>>) attributes {dimension_semantics = [#tpu.dimension_semantics<parallel>], iteration_bounds = array<i64: 2>, scalar_prefetch = 0 : i64, scratch_operands = 0 : i64, tpu.core_type = #tpu.core_type<tc>, window_params = [{transform_indices = @transform_0, window_bounds = array<i64: 2, 8, 16>}, {transform_indices = @transform_1, window_bounds = array<i64: 2, 8, 32>}, {pipeline_mode = #tpu.pipeline_mode<synchronous>, transform_indices = @transform_2, window_bounds = array<i64: 32, 32>}, {pipeline_mode = #tpu.pipeline_mode<synchronous>, transform_indices = @transform_3, window_bounds = array<i64: 16, 16>}, {transform_indices = @transform_4, window_bounds = array<i64: 2, 8, 16>}]} {
    %c0 = arith.constant 0 : index
    %c0_0 = arith.constant 0 : index
    %c0_1 = arith.constant 0 : index
    %0 = vector.load %arg2[%c0, %c0_0, %c0_1] : memref<2x8x32xf32, #tpu.memory_space<vmem>>, vector<2x8x32xf32>
    %c0_2 = arith.constant 0 : index
    %c0_3 = arith.constant 0 : index
    %c0_4 = arith.constant 0 : index
    %1 = vector.load %arg1[%c0_2, %c0_3, %c0_4] : memref<2x8x16xf32, #tpu.memory_space<vmem>>, vector<2x8x16xf32>
    %2 = vector.shape_cast %1 : vector<2x8x16xf32> to vector<16x16xf32>
    %c0_5 = arith.constant 0 : index
    %c0_6 = arith.constant 0 : index
    %3 = vector.load %arg4[%c0_5, %c0_6] : memref<16x16xf32, #tpu.memory_space<vmem>>, vector<16x16xf32>
    %cst = arith.constant dense<0.000000e+00> : vector<16x16xf32>
    %4 = tpu.matmul %2, %3, %cst {dimension_numbers = #tpu.dot_dimension_numbers<[1], [0], [0], [1], [0, 0, 1, 1], [], []>} : vector<16x16xf32>, vector<16x16xf32>, vector<16x16xf32> -> vector<16x16xf32>
    %5 = vector.shape_cast %0 : vector<2x8x32xf32> to vector<16x32xf32>
    %c0_7 = arith.constant 0 : index
    %c0_8 = arith.constant 0 : index
    %6 = vector.load %arg3[%c0_7, %c0_8] : memref<32x32xf32, #tpu.memory_space<vmem>>, vector<32x32xf32>
    %cst_9 = arith.constant dense<0.000000e+00> : vector<16x32xf32>
    %7 = tpu.matmul %5, %6, %cst_9 {dimension_numbers = #tpu.dot_dimension_numbers<[1], [0], [0], [1], [0, 0, 1, 1], [], []>} : vector<16x32xf32>, vector<32x32xf32>, vector<16x32xf32> -> vector<16x32xf32>
    %8 = vector.shape_cast %7 : vector<16x32xf32> to vector<2x8x32xf32>
    "tpu.trace_start"() <{level = 10 : i32, message = "bne,bme->bnm"}> : () -> ()
    %cst_10 = arith.constant dense<0.000000e+00> : vector<2x8x8xf32>
    %9 = tpu.matmul %8, %0, %cst_10 {dimension_numbers = #tpu.dot_dimension_numbers<[2], [2], [1], [1], [0, 0, 0, 1, 1, 1], [0], [0]>} : vector<2x8x32xf32>, vector<2x8x32xf32>, vector<2x8x8xf32> -> vector<2x8x8xf32>
    "tpu.trace_stop"() : () -> ()
    %10 = arith.negf %9 : vector<2x8x8xf32>
    %11 = math.exp %10 : vector<2x8x8xf32>
    %cst_11 = arith.constant 1.000000e+00 : f32
    %12 = vector.broadcast %cst_11 : f32 to vector<2x8x8xf32>
    %13 = arith.addf %12, %11 : vector<2x8x8xf32>
    %14 = arith.divf %12, %13 : vector<2x8x8xf32>
    %15 = vector.shape_cast %4 : vector<16x16xf32> to vector<2x8x16xf32>
    "tpu.trace_start"() <{level = 10 : i32, message = "bnm,bmg->bng"}> : () -> ()
    %cst_12 = arith.constant dense<0.000000e+00> : vector<2x8x16xf32>
    %16 = tpu.matmul %14, %15, %cst_12 {dimension_numbers = #tpu.dot_dimension_numbers<[2], [1], [1], [2], [0, 0, 0, 1, 1, 2], [0], [0]>} : vector<2x8x8xf32>, vector<2x8x16xf32>, vector<2x8x16xf32> -> vector<2x8x16xf32>
    "tpu.trace_stop"() : () -> ()
    %cst_13 = arith.constant 1.250000e-01 : f32
    %17 = vector.broadcast %cst_13 : f32 to vector<2x8x16xf32>
    %18 = arith.mulf %16, %17 : vector<2x8x16xf32>
    %c0_14 = arith.constant 0 : index
    %c0_15 = arith.constant 0 : index
    %c0_16 = arith.constant 0 : index
    %19 = vector.load %arg5[%c0_14, %c0_15, %c0_16] : memref<2x8x16xf32, #tpu.memory_space<vmem>>, vector<2x8x16xf32>
    tpu.vector_store %arg5[%c0_14, %c0_15, %c0_16], %18 {strides = array<i32>} : memref<2x8x16xf32, #tpu.memory_space<vmem>>, vector<2x8x16xf32>,
    return
  }
  func.func @transform_0(%arg0: i32) -> (i32, i32, i32) {
    %c0_i32 = arith.constant 0 : i32
    %c0_i32_0 = arith.constant 0 : i32
    %c0_i32_1 = arith.constant 0 : i32
    return %arg0, %c0_i32, %c0_i32_0 : i32, i32, i32
  }
  func.func @transform_1(%arg0: i32) -> (i32, i32, i32) {
    %c0_i32 = arith.constant 0 : i32
    %c0_i32_0 = arith.constant 0 : i32
    %c0_i32_1 = arith.constant 0 : i32
    return %arg0, %c0_i32, %c0_i32_0 : i32, i32, i32
  }
  func.func @transform_2(%arg0: i32) -> (i32, i32) {
    %c0_i32 = arith.constant 0 : i32
    %c0_i32_0 = arith.constant 0 : i32
    %c0_i32_1 = arith.constant 0 : i32
    return %c0_i32, %c0_i32_0 : i32, i32
  }
  func.func @transform_3(%arg0: i32) -> (i32, i32) {
    %c0_i32 = arith.constant 0 : i32
    %c0_i32_0 = arith.constant 0 : i32
    %c0_i32_1 = arith.constant 0 : i32
    return %c0_i32, %c0_i32_0 : i32, i32
  }
  func.func @transform_4(%arg0: i32) -> (i32, i32, i32) {
    %c0_i32 = arith.constant 0 : i32
    %c0_i32_0 = arith.constant 0 : i32
    %c0_i32_1 = arith.constant 0 : i32
    return %arg0, %c0_i32, %c0_i32_0 : i32, i32, i32
  }
}

</mosaic_0001>

<llo_original>
// kernel: tpu_custom_call.1
$region0: #{tpu_custom_call.1}
  #allocation0 [shape = 'u32[]', space=smem, size = 0x4, offset = 0x4, fixed_abs, tag = 'smem constant byte address 0x4 - core index']
  #allocation1 [shape = 'u32[144,128]{1,0:T(1,128)}', space=vmem, size = 0x12000, scoped, tag = 'internal scratch']
  %s0 = inlined_call_operand.hbm [shape: f32[4,8,16], index: 0, kind: input, shape index: {}]
  %s1 = inlined_call_operand.hbm [shape: f32[4,8,32], index: 1, kind: input, shape index: {}]
  %s2 = inlined_call_operand.hbm [shape: f32[32,32], index: 2, kind: input, shape index: {}]
  %s3 = inlined_call_operand.hbm [shape: f32[16,16], index: 3, kind: input, shape index: {}]
  %s4 = inlined_call_operand.hbm [shape: f32[4,8,16], index: 4, kind: output, shape index: {}]
  %s5 = sld [smem:[#allocation0]]
  $region65: #{tpu_custom_call.1} parent=0
    _
  %s7 = ssub.s32 1, %s5
  %s8 = scalar_select 0, %s7, %s5
  $region1: #{tpu_custom_call.1} parent=0
    #allocation2 [shape = 'u8[16384]{0}', space=vmem, size = 0x4000, scoped, tag = 'input window, operand 0']
    #allocation3 [shape = 's32[2]{0}', space=sflag, size = 0x8, scoped, tag = 'scoped memory for tpu_custom_call.1']
    #allocation4 [shape = 's32[2]{0}', space=sflag, size = 0x8, scoped, tag = 'scoped memory for tpu_custom_call.1']
    #allocation5 [shape = 'u8[16384]{0}', space=vmem, size = 0x4000, scoped, tag = 'input window, operand 1']
    #allocation6 [shape = 's32[2]{0}', space=sflag, size = 0x8, scoped, tag = 'scoped memory for tpu_custom_call.1']
    #allocation7 [shape = 'u8[16384]{0}', space=vmem, size = 0x4000, scoped, tag = 'input window, operand 2, single buffered']
    #allocation8 [shape = 'u8[8192]{0}', space=vmem, size = 0x2000, scoped, tag = 'input window, operand 3, single buffered']
    #allocation9 [shape = 's32[1]{0}', space=sflag, size = 0x4, scoped, tag = 'scoped memory for tpu_custom_call.1']
    #allocation10 [shape = 'u8[16384]{0}', space=vmem, size = 0x4000, scoped, tag = 'output window, operand 0']
    %9 = vsyncpa [#allocation3], 0
    %s10 = scalar_lea.sflag [#allocation3], 1
    %11 = vsyncpa %s10, 0
    %12 = vsyncpa [#allocation6], 0
    %s13 = scalar_lea.sflag [#allocation6], 1
    %14 = vsyncpa %s13, 0
    %15 = vsyncpa [#allocation9], 0
    %16 = vsyncpa [#allocation4], 0
    %s17 = scalar_lea.sflag [#allocation4], 1
    %18 = vsyncpa %s17, 0
    loop: start=0, step=1, limit=4
    $region2: #{tpu_custom_call.1} parent=1 // loop_pre_header
      _
    $region3: #{tpu_custom_call.1} parent=1 // loop_header
      %s20 = sphi 0, %s24
      %p21 = scmp.ge.s32.totalorder %s20, 4
      %s30 = sphi 0, %s32
      %s33 = sphi 0, %s30
      %s34 = sphi 0, %s33
      %s50 = sphi 0, %s34
      %s56 = sphi 0, %s58
      %s59 = sphi 0, %s56
      %s60 = sphi 0, %s59
      %s76 = sphi 0, %s60
      %s80 = sphi 0, %s80
      %s82 = sphi 0, %s80
      %s83 = sphi 0, %s82
      %s97 = sphi 0, %s83
      %s101 = sphi 0, %s101
      %s103 = sphi 0, %s101
      %s104 = sphi 0, %s103
      %s118 = sphi 0, %s104
      %s124 = sphi 0, %s126
      %s127 = sphi 0, %s124
      %s128 = sphi 0, %s127
      %s144 = sphi 0, %s128
    $region4: #{tpu_custom_call.1} parent=1 // loop_header_branch
      %23 = sbr.rel (%p21) target = $region8
    $region5: #{tpu_custom_call.1} parent=1 // loop_body
      %s25 = ssub.s32 %s20, 1
      %s26 = ssub.s32 %s20, 2
      %s27 = sadd.s32 %s20, 1
      %s28 = ssub.s32 %s20, %s27
      %p29 = scmp.eq.s32.totalorder %s28, 0
      %s31 = sadd.s32 %s30, 1
      %s32 = scalar_select %p29, %s30, %s31
      %p35 = pneg %p29
      %p36 = scmp.eq.s32.totalorder %s20, 1
      %p37 = por %p35, %p36
      %p38 = scmp.ne.s32.totalorder %s30, %s33
      %p39 = scmp.eq.s32.totalorder %s20, 0
      %p40 = por %p38, %p39
      %p41 = scmp.ne.s32.totalorder %s30, %s33
      %p42 = scmp.eq.s32.totalorder %s25, 1
      %p43 = por %p41, %p42
      %p44 = scmp.ne.s32.totalorder %s33, %s34
      %p45 = scmp.eq.s32.totalorder %s25, 0
      %p46 = por %p44, %p45
      %p47 = scmp.ne.s32.totalorder %s33, %s34
      %p48 = scmp.eq.s32.totalorder %s26, 1
      %p49 = por %p47, %p48
      %p51 = scmp.ne.s32.totalorder %s34, %s50
      %p52 = scmp.eq.s32.totalorder %s26, 0
      %p53 = por %p51, %p52
      %s54 = ssub.s32 %s20, %s27
      %p55 = scmp.eq.s32.totalorder %s54, 0
      %s57 = sadd.s32 %s56, 1
      %s58 = scalar_select %p55, %s56, %s57
      %p61 = pneg %p55
      %p62 = scmp.eq.s32.totalorder %s20, 1
      %p63 = por %p61, %p62
      %p64 = scmp.ne.s32.totalorder %s56, %s59
      %p65 = scmp.eq.s32.totalorder %s20, 0
      %p66 = por %p64, %p65
      %p67 = scmp.ne.s32.totalorder %s56, %s59
      %p68 = scmp.eq.s32.totalorder %s25, 1
      %p69 = por %p67, %p68
      %p70 = scmp.ne.s32.totalorder %s59, %s60
      %p71 = scmp.eq.s32.totalorder %s25, 0
      %p72 = por %p70, %p71
      %p73 = scmp.ne.s32.totalorder %s59, %s60
      %p74 = scmp.eq.s32.totalorder %s26, 1
      %p75 = por %p73, %p74
      %p77 = scmp.ne.s32.totalorder %s60, %s76
      %p78 = scmp.eq.s32.totalorder %s26, 0
      %p79 = por %p77, %p78
      %s81 = sadd.s32 %s80, 1
      %p84 = scmp.eq.s32.totalorder %s20, 1
      %p85 = scmp.ne.s32.totalorder %s80, %s82
      %p86 = scmp.eq.s32.totalorder %s20, 0
      %p87 = por %p85, %p86
      %p88 = scmp.ne.s32.totalorder %s80, %s82
      %p89 = scmp.eq.s32.totalorder %s25, 1
      %p90 = por %p88, %p89
      %p91 = scmp.ne.s32.totalorder %s82, %s83
      %p92 = scmp.eq.s32.totalorder %s25, 0
      %p93 = por %p91, %p92
      %p94 = scmp.ne.s32.totalorder %s82, %s83
      %p95 = scmp.eq.s32.totalorder %s26, 1
      %p96 = por %p94, %p95
      %p98 = scmp.ne.s32.totalorder %s83, %s97
      %p99 = scmp.eq.s32.totalorder %s26, 0
      %p100 = por %p98, %p99
      %s102 = sadd.s32 %s101, 1
      %p105 = scmp.eq.s32.totalorder %s20, 1
      %p106 = scmp.ne.s32.totalorder %s101, %s103
      %p107 = scmp.eq.s32.totalorder %s20, 0
      %p108 = por %p106, %p107
      %p109 = scmp.ne.s32.totalorder %s101, %s103
      %p110 = scmp.eq.s32.totalorder %s25, 1
      %p111 = por %p109, %p110
      %p112 = scmp.ne.s32.totalorder %s103, %s104
      %p113 = scmp.eq.s32.totalorder %s25, 0
      %p114 = por %p112, %p113
      %p115 = scmp.ne.s32.totalorder %s103, %s104
      %p116 = scmp.eq.s32.totalorder %s26, 1
      %p117 = por %p115, %p116
      %p119 = scmp.ne.s32.totalorder %s104, %s118
      %p120 = scmp.eq.s32.totalorder %s26, 0
      %p121 = por %p119, %p120
      %s122 = ssub.s32 %s20, %s27
      %p123 = scmp.eq.s32.totalorder %s122, 0
      %s125 = sadd.s32 %s124, 1
      %s126 = scalar_select %p123, %s124, %s125
      %p129 = pneg %p123
      %p130 = scmp.eq.s32.totalorder %s20, 1
      %p131 = por %p129, %p130
      %p132 = scmp.ne.s32.totalorder %s124, %s127
      %p133 = scmp.eq.s32.totalorder %s20, 0
      %p134 = por %p132, %p133
      %p135 = scmp.ne.s32.totalorder %s124, %s127
      %p136 = scmp.eq.s32.totalorder %s25, 1
      %p137 = por %p135, %p136
      %p138 = scmp.ne.s32.totalorder %s127, %s128
      %p139 = scmp.eq.s32.totalorder %s25, 0
      %p140 = por %p138, %p139
      %p141 = scmp.ne.s32.totalorder %s127, %s128
      %p142 = scmp.eq.s32.totalorder %s26, 1
      %p143 = por %p141, %p142
      %p145 = scmp.ne.s32.totalorder %s128, %s144
      %p146 = scmp.eq.s32.totalorder %s26, 0
      %p147 = por %p145, %p146
      %p148 = scmp.le.s32.totalorder 1, %s20
      %p149 = scmp.lt.s32.totalorder %s20, 3
      %p150 = pnand %p148, %p149
      %p151 = pneg %p150
      // Predicated region
      $region9: #{tpu_custom_call.1} parent=5 // pred_check
        _
      $region10: #{tpu_custom_call.1} parent=5 // pred_check_branch
        %153 = sbr.rel (%p150) target = $region12
      $region11: #{tpu_custom_call.1} parent=5 // pred_region
        %s154 = ssub.s32 %s20, 1
        // Predicated region
        $region13: #{tpu_custom_call.1} parent=11 // pred_check
          %p155 = pneg %p93
        $region14: #{tpu_custom_call.1} parent=11 // pred_check_branch
          %157 = sbr.rel (%p155) target = $region16
        $region15: #{tpu_custom_call.1} parent=11 // pred_region
          %s159 = ssub.s32 512, 512
          %160 = vsyncadd [#allocation6], %s159
          %s161 = sshll.u32 [#allocation7], 4
          %s162 = int_to_ptr.vmem [resolvable:$true] %s161
          %167 = dma.hbm_to_vmem [thread:$0]  %s2, 512, %s162, [#allocation6], 128, 128, 8
        $region16: #{tpu_custom_call.1} parent=11 // pred_fallthru
          _
        // Predicated region
        $region17: #{tpu_custom_call.1} parent=11 // pred_check
          %p168 = pneg %p114
        $region18: #{tpu_custom_call.1} parent=11 // pred_check_branch
          %170 = sbr.rel (%p168) target = $region20
        $region19: #{tpu_custom_call.1} parent=11 // pred_region
          %s172 = ssub.s32 256, 256
          %173 = vsyncadd [#allocation9], %s172
          %s174 = sshll.u32 [#allocation8], 4
          %s175 = int_to_ptr.vmem [resolvable:$true] %s174
          %180 = dma.hbm_to_vmem [thread:$0]  %s3, 256, %s175, [#allocation9], 128, 128, 8
        $region20: #{tpu_custom_call.1} parent=11 // pred_fallthru
          _
      $region12: #{tpu_custom_call.1} parent=5 // pred_fallthru
        _
      %p181 = scmp.lt.s32.totalorder %s20, 2
      // Predicated region
      $region21: #{tpu_custom_call.1} parent=5 // pred_check
        %p182 = pneg %p181
      $region22: #{tpu_custom_call.1} parent=5 // pred_check_branch
        %184 = sbr.rel (%p182) target = $region24
      $region23: #{tpu_custom_call.1} parent=5 // pred_region
        // Predicated region
        $region25: #{tpu_custom_call.1} parent=23 // pred_check
          %p185 = pneg %p40
        $region26: #{tpu_custom_call.1} parent=23 // pred_check_branch
          %187 = sbr.rel (%p185) target = $region28
        $region27: #{tpu_custom_call.1} parent=23 // pred_region
          %s188 = sand.u32 %s30, 1
          %s189 = scalar_lea.sflag [#allocation3], %s188
          %s190 = sand.u32 %s30, 1
          %s191 = smul.addr %s190, 16
          %s192 = scalar_lea.vmem [#allocation2], %s191
          %s193 = smul.u32 2, %s20
          %s195 = ssub.s32 256, 256
          %196 = vsyncadd %s189, %s195
          %s197 = smul.addr %s193, 128
          %s198 = scalar_lea.hbm %s0, %s197
          %s199 = sshll.u32 %s192, 4
          %s200 = int_to_ptr.vmem [resolvable:$true] %s199
          %205 = dma.hbm_to_vmem [thread:$0]  %s198, 256, %s200, %s189, 128, 128, 8
        $region28: #{tpu_custom_call.1} parent=23 // pred_fallthru
          _
        // Predicated region
        $region29: #{tpu_custom_call.1} parent=23 // pred_check
          %p206 = pneg %p66
        $region30: #{tpu_custom_call.1} parent=23 // pred_check_branch
          %208 = sbr.rel (%p206) target = $region32
        $region31: #{tpu_custom_call.1} parent=23 // pred_region
          %s209 = sand.u32 %s20, 1
          %s210 = scalar_lea.sflag [#allocation6], %s209
          %s211 = sand.u32 %s56, 1
          %s212 = smul.addr %s211, 16
          %s213 = scalar_lea.vmem [#allocation5], %s212
          %s214 = smul.u32 2, %s20
          %s216 = ssub.s32 256, 256
          %217 = vsyncadd %s210, %s216
          %s218 = smul.addr %s214, 128
          %s219 = scalar_lea.hbm %s1, %s218
          %s220 = sshll.u32 %s213, 4
          %s221 = int_to_ptr.vmem [resolvable:$true] %s220
          %226 = dma.hbm_to_vmem [thread:$0]  %s219, 256, %s221, %s210, 128, 128, 8
        $region32: #{tpu_custom_call.1} parent=23 // pred_fallthru
          _
      $region24: #{tpu_custom_call.1} parent=5 // pred_fallthru
        _
      %p227 = scmp.le.s32.totalorder 1, %s20
      %p228 = scmp.lt.s32.totalorder %s20, 3
      %p229 = pnand %p227, %p228
      %p230 = pneg %p229
      // Predicated region
      $region33: #{tpu_custom_call.1} parent=5 // pred_check
        _
      $region34: #{tpu_custom_call.1} parent=5 // pred_check_branch
        %232 = sbr.rel (%p229) target = $region36
      $region35: #{tpu_custom_call.1} parent=5 // pred_region
        %s233 = ssub.s32 %s20, 1
        %s234 = sand.u32 %s33, 1
        %s235 = scalar_lea.sflag [#allocation3], %s234
        %s236 = sand.u32 %s33, 1
        %s237 = smul.addr %s236, 16
        %s238 = scalar_lea.vmem [#allocation2], %s237
        // Predicated region
        $region37: #{tpu_custom_call.1} parent=35 // pred_check
          %p239 = pneg %p46
        $region38: #{tpu_custom_call.1} parent=35 // pred_check_branch
          %241 = sbr.rel (%p239) target = $region40
        $region39: #{tpu_custom_call.1} parent=35 // pred_region
          %242 = dma.done %s235, 256
        $region40: #{tpu_custom_call.1} parent=35 // pred_fallthru
          _
        %s243 = sand.u32 %s25, 1
        %s244 = scalar_lea.sflag [#allocation6], %s243
        %s245 = sand.u32 %s59, 1
        %s246 = smul.addr %s245, 16
        %s247 = scalar_lea.vmem [#allocation5], %s246
        // Predicated region
        $region41: #{tpu_custom_call.1} parent=35 // pred_check
          %p248 = pneg %p72
        $region42: #{tpu_custom_call.1} parent=35 // pred_check_branch
          %250 = sbr.rel (%p248) target = $region44
        $region43: #{tpu_custom_call.1} parent=35 // pred_region
          %251 = dma.done %s244, 256
        $region44: #{tpu_custom_call.1} parent=35 // pred_fallthru
          _
        // Predicated region
        $region45: #{tpu_custom_call.1} parent=35 // pred_check
          %p252 = pneg %p93
        $region46: #{tpu_custom_call.1} parent=35 // pred_check_branch
          %254 = sbr.rel (%p252) target = $region48
        $region47: #{tpu_custom_call.1} parent=35 // pred_region
          %255 = dma.done [#allocation6], 512
        $region48: #{tpu_custom_call.1} parent=35 // pred_fallthru
          _
        // Predicated region
        $region49: #{tpu_custom_call.1} parent=35 // pred_check
          %p256 = pneg %p114
        $region50: #{tpu_custom_call.1} parent=35 // pred_check_branch
          %258 = sbr.rel (%p256) target = $region52
        $region51: #{tpu_custom_call.1} parent=35 // pred_region
          %259 = dma.done [#allocation9], 256
        $region52: #{tpu_custom_call.1} parent=35 // pred_fallthru
          _
        %s260 = sand.u32 %s33, 1
        %s261 = scalar_lea.sflag [#allocation3], %s260
        %s262 = sand.u32 %s33, 1
        %s263 = smul.addr %s262, 16
        %s264 = scalar_lea.vmem [#allocation2], %s263
        %p265 = pneg %p46
        %p266 = pneg %p43
        %s267 = sand.u32 %s25, 1
        %s268 = scalar_lea.sflag [#allocation6], %s267
        %s269 = sand.u32 %s59, 1
        %s270 = smul.addr %s269, 16
        %s271 = scalar_lea.vmem [#allocation5], %s270
        %p272 = pneg %p72
        %p273 = pneg %p69
        %p274 = pneg %p93
        %p275 = pneg %p90
        %p276 = pneg %p114
        %p277 = pneg %p111
        %p278 = pneg %p140
        %p279 = pneg %p137
        %s280 = sand.u32 %s127, 1
        %s281 = scalar_lea.sflag [#allocation4], %s280
        %s282 = sand.u32 %s127, 1
        %s283 = smul.addr %s282, 16
        %s284 = scalar_lea.vmem [#allocation10], %s283
        %s285 = smul.u32 2, %s25
        %s286 = smul.u32 2, %s25
        %s287 = smul.u32 2, %s25
        %v288 = vld [vmem:[%s247] sm:$0xff]
        %v289 = vld [vmem:[%s247 + $0x8] sm:$0xff]
        %v290 = vld [vmem:[%s238] sm:$0xff]
        %v291 = vld [vmem:[%s238 + $0x8] sm:$0xff]
        %v292 = vld [vmem:[#allocation8] sm:$0xff]
        %v293 = vld [vmem:[#allocation8 + $0x8] sm:$0xff]
        %vm294 = vcmask 130048
        %v296 = vsel %vm294, %v290, 0
        %v299 = vsel %vm294, %v291, 0
        %301 = vmatprep.subr.mxu0 0.0
        %302 = vmatpush1.msra.mxu0 %v292
        %303 = vmatprep.subr.mxu0 0.0
        %304 = vmatpush1.msra.mxu0 %v293
        %305 = vmatprep.subr.mxu0 0.0
        %306 = vmatpush1.msra.mxu0 0.0
        %307 = vmatprep.subr.mxu0 0.0
        %308 = vmatpush1.msra.mxu0 0.0
        %309 = vmatprep.subr.mxu0 0.0
        %310 = vmatpush1.msra.mxu0 0.0
        %311 = vmatprep.subr.mxu0 0.0
        %312 = vmatpush1.msra.mxu0 0.0
        %313 = vmatprep.subr.mxu0 0.0
        %314 = vmatpush1.msra.mxu0 0.0
        %315 = vmatprep.subr.mxu0 0.0
        %316 = vmatpush1.msra.mxu0 0.0
        %317 = vmatprep.subr.mxu0 0.0
        %318 = vmatpush1.msra.mxu0 0.0
        %319 = vmatprep.subr.mxu0 0.0
        %320 = vmatpush1.msra.mxu0 0.0
        %321 = vmatprep.subr.mxu0 0.0
        %322 = vmatpush1.msra.mxu0 0.0
        %323 = vmatprep.subr.mxu0 0.0
        %324 = vmatpush1.msra.mxu0 0.0
        %325 = vmatprep.subr.mxu0 0.0
        %326 = vmatpush1.msra.mxu0 0.0
        %327 = vmatprep.subr.mxu0 0.0
        %328 = vmatpush1.msra.mxu0 0.0
        %329 = vmatprep.subr.mxu0 0.0
        %330 = vmatpush1.msra.mxu0 0.0
        %331 = vmatprep.subr.mxu0 0.0
        %332 = vmatpush1.msra.mxu0 0.0
        %333 = vmatprep.subr.mxu0 0.0
        %334 = vmatpush1.msra.mxu0 0.0
        %335 = vmatprep.subr.mxu0 0.0
        %336 = vmatpush1.msra.mxu0 0.0
        %337 = vmatprep.subr.mxu0 0.0
        %338 = vmatpush1.msra.mxu0 0.0
        %339 = vmatprep.subr.mxu0 0.0
        %340 = vmatpush1.msra.mxu0 0.0
        %341 = vmatprep.subr.mxu0 0.0
        %342 = vmatpush1.msra.mxu0 0.0
        %343 = vmatprep.subr.mxu0 0.0
        %344 = vmatpush1.msra.mxu0 0.0
        %345 = vmatprep.subr.mxu0 0.0
        %346 = vmatpush1.msra.mxu0 0.0
        %347 = vmatprep.subr.mxu0 0.0
        %348 = vmatpush1.msra.mxu0 0.0
        %349 = vmatprep.subr.mxu0 0.0
        %350 = vmatpush1.msra.mxu0 0.0
        %351 = vmatprep.subr.mxu0 0.0
        %352 = vmatpush1.msra.mxu0 0.0
        %353 = vmatprep.subr.mxu0 0.0
        %354 = vmatpush1.msra.mxu0 0.0
        %355 = vmatprep.subr.mxu0 0.0
        %356 = vmatpush1.msra.mxu0 0.0
        %357 = vmatprep.subr.mxu0 0.0
        %358 = vmatpush1.msra.mxu0 0.0
        %359 = vmatprep.subr.mxu0 0.0
        %360 = vmatpush1.msra.mxu0 0.0
        %361 = vmatprep.subr.mxu0 0.0
        %362 = vmatpush1.msra.mxu0 0.0
        %363 = vmatprep.subr.mxu0 0.0
        %364 = vmatpush1.msra.mxu0 0.0
        %365 = vmatprep.mubr.f32.mxu0 0.0
        %366 = vmatmul.mubr.f32.gmra.mrb[0].mxu0 %v296
        %v367 = vpop.f32.mrb[0].mxu0
        %v368 = vadd.f32 0.0, %v367
        %v369 = vpop.f32.mrb[0].mxu0
        %370 = vmatprep.mubr.f32.mxu0 0.0
        %371 = vmatmul.mubr.f32.gmra.mrb[0].mxu0 %v299
        %v372 = vpop.f32.mrb[0].mxu0
        %v373 = vadd.f32 0.0, %v372
        %v374 = vpop.f32.mrb[0].mxu0
        %375 = vdwg.mxu0
        %v376 = vld [vmem:[#allocation7] sm:$0xff]
        %v377 = vld [vmem:[#allocation7 + $0x8] sm:$0xff]
        %v378 = vld [vmem:[#allocation7 + $0x10] sm:$0xff]
        %v379 = vld [vmem:[#allocation7 + $0x18] sm:$0xff]
        %vm380 = vcmask 261120
        %v382 = vsel %vm380, %v288, 0
        %v385 = vsel %vm380, %v289, 0
        %387 = vmatprep.subr.mxu0 0.0
        %388 = vmatpush1.msra.mxu0 %v376
        %389 = vmatprep.subr.mxu0 0.0
        %390 = vmatpush1.msra.mxu0 %v377
        %391 = vmatprep.subr.mxu0 0.0
        %392 = vmatpush1.msra.mxu0 %v378
        %393 = vmatprep.subr.mxu0 0.0
        %394 = vmatpush1.msra.mxu0 %v379
        %395 = vmatprep.subr.mxu0 0.0
        %396 = vmatpush1.msra.mxu0 0.0
        %397 = vmatprep.subr.mxu0 0.0
        %398 = vmatpush1.msra.mxu0 0.0
        %399 = vmatprep.subr.mxu0 0.0
        %400 = vmatpush1.msra.mxu0 0.0
        %401 = vmatprep.subr.mxu0 0.0
        %402 = vmatpush1.msra.mxu0 0.0
        %403 = vmatprep.subr.mxu0 0.0
        %404 = vmatpush1.msra.mxu0 0.0
        %405 = vmatprep.subr.mxu0 0.0
        %406 = vmatpush1.msra.mxu0 0.0
        %407 = vmatprep.subr.mxu0 0.0
        %408 = vmatpush1.msra.mxu0 0.0
        %409 = vmatprep.subr.mxu0 0.0
        %410 = vmatpush1.msra.mxu0 0.0
        %411 = vmatprep.subr.mxu0 0.0
        %412 = vmatpush1.msra.mxu0 0.0
        %413 = vmatprep.subr.mxu0 0.0
        %414 = vmatpush1.msra.mxu0 0.0
        %415 = vmatprep.subr.mxu0 0.0
        %416 = vmatpush1.msra.mxu0 0.0
        %417 = vmatprep.subr.mxu0 0.0
        %418 = vmatpush1.msra.mxu0 0.0
        %419 = vmatprep.subr.mxu0 0.0
        %420 = vmatpush1.msra.mxu0 0.0
        %421 = vmatprep.subr.mxu0 0.0
        %422 = vmatpush1.msra.mxu0 0.0
        %423 = vmatprep.subr.mxu0 0.0
        %424 = vmatpush1.msra.mxu0 0.0
        %425 = vmatprep.subr.mxu0 0.0
        %426 = vmatpush1.msra.mxu0 0.0
        %427 = vmatprep.subr.mxu0 0.0
        %428 = vmatpush1.msra.mxu0 0.0
        %429 = vmatprep.subr.mxu0 0.0
        %430 = vmatpush1.msra.mxu0 0.0
        %431 = vmatprep.subr.mxu0 0.0
        %432 = vmatpush1.msra.mxu0 0.0
        %433 = vmatprep.subr.mxu0 0.0
        %434 = vmatpush1.msra.mxu0 0.0
        %435 = vmatprep.subr.mxu0 0.0
        %436 = vmatpush1.msra.mxu0 0.0
        %437 = vmatprep.subr.mxu0 0.0
        %438 = vmatpush1.msra.mxu0 0.0
        %439 = vmatprep.subr.mxu0 0.0
        %440 = vmatpush1.msra.mxu0 0.0
        %441 = vmatprep.subr.mxu0 0.0
        %442 = vmatpush1.msra.mxu0 0.0
        %443 = vmatprep.subr.mxu0 0.0
        %444 = vmatpush1.msra.mxu0 0.0
        %445 = vmatprep.subr.mxu0 0.0
        %446 = vmatpush1.msra.mxu0 0.0
        %447 = vmatprep.subr.mxu0 0.0
        %448 = vmatpush1.msra.mxu0 0.0
        %449 = vmatprep.subr.mxu0 0.0
        %450 = vmatpush1.msra.mxu0 0.0
        %451 = vmatprep.mubr.f32.mxu0 0.0
        %452 = vmatmul.mubr.f32.gmra.mrb[0].mxu0 %v382
        %v453 = vpop.f32.mrb[0].mxu0
        %v454 = vadd.f32 0.0, %v453
        %v455 = vpop.f32.mrb[0].mxu0
        %456 = vmatprep.mubr.f32.mxu0 0.0
        %457 = vmatmul.mubr.f32.gmra.mrb[0].mxu0 %v385
        %v458 = vpop.f32.mrb[0].mxu0
        %v459 = vadd.f32 0.0, %v458
        %v460 = vpop.f32.mrb[0].mxu0
        %461 = vdwg.mxu0
        %v463 = vsel %vm380, %v454, 0
        %465 = vmatprep.subr.mxu0 0.0
        %466 = vmatpush1.xpose.msra.mxu0 %v382
        %467 = vmatprep.subr.mxu0 0.0
        %468 = vmatpush1.xpose.msra.mxu0 0.0
        %469 = vmatprep.subr.mxu0 0.0
        %470 = vmatpush1.xpose.msra.mxu0 0.0
        %471 = vmatprep.subr.mxu0 0.0
        %472 = vmatpush1.xpose.msra.mxu0 0.0
        %473 = vmatprep.subr.mxu0 0.0
        %474 = vmatpush1.xpose.msra.mxu0 0.0
        %475 = vmatprep.subr.mxu0 0.0
        %476 = vmatpush1.xpose.msra.mxu0 0.0
        %477 = vmatprep.subr.mxu0 0.0
        %478 = vmatpush1.xpose.msra.mxu0 0.0
        %479 = vmatprep.subr.mxu0 0.0
        %480 = vmatpush1.xpose.msra.mxu0 0.0
        %481 = vmatprep.subr.mxu0 0.0
        %482 = vmatpush1.xpose.msra.mxu0 0.0
        %483 = vmatprep.subr.mxu0 0.0
        %484 = vmatpush1.xpose.msra.mxu0 0.0
        %485 = vmatprep.subr.mxu0 0.0
        %486 = vmatpush1.xpose.msra.mxu0 0.0
        %487 = vmatprep.subr.mxu0 0.0
        %488 = vmatpush1.xpose.msra.mxu0 0.0
        %489 = vmatprep.subr.mxu0 0.0
        %490 = vmatpush1.xpose.msra.mxu0 0.0
        %491 = vmatprep.subr.mxu0 0.0
        %492 = vmatpush1.xpose.msra.mxu0 0.0
        %493 = vmatprep.subr.mxu0 0.0
        %494 = vmatpush1.xpose.msra.mxu0 0.0
        %495 = vmatprep.subr.mxu0 0.0
        %496 = vmatpush1.xpose.msra.mxu0 0.0
        %497 = vmatprep.subr.mxu0 0.0
        %498 = vmatpush1.xpose.msra.mxu0 0.0
        %499 = vmatprep.subr.mxu0 0.0
        %500 = vmatpush1.xpose.msra.mxu0 0.0
        %501 = vmatprep.subr.mxu0 0.0
        %502 = vmatpush1.xpose.msra.mxu0 0.0
        %503 = vmatprep.subr.mxu0 0.0
        %504 = vmatpush1.xpose.msra.mxu0 0.0
        %505 = vmatprep.subr.mxu0 0.0
        %506 = vmatpush1.xpose.msra.mxu0 0.0
        %507 = vmatprep.subr.mxu0 0.0
        %508 = vmatpush1.xpose.msra.mxu0 0.0
        %509 = vmatprep.subr.mxu0 0.0
        %510 = vmatpush1.xpose.msra.mxu0 0.0
        %511 = vmatprep.subr.mxu0 0.0
        %512 = vmatpush1.xpose.msra.mxu0 0.0
        %513 = vmatprep.subr.mxu0 0.0
        %514 = vmatpush1.xpose.msra.mxu0 0.0
        %515 = vmatprep.subr.mxu0 0.0
        %516 = vmatpush1.xpose.msra.mxu0 0.0
        %517 = vmatprep.subr.mxu0 0.0
        %518 = vmatpush1.xpose.msra.mxu0 0.0
        %519 = vmatprep.subr.mxu0 0.0
        %520 = vmatpush1.xpose.msra.mxu0 0.0
        %521 = vmatprep.subr.mxu0 0.0
        %522 = vmatpush1.xpose.msra.mxu0 0.0
        %523 = vmatprep.subr.mxu0 0.0
        %524 = vmatpush1.xpose.msra.mxu0 0.0
        %525 = vmatprep.subr.mxu0 0.0
        %526 = vmatpush1.xpose.msra.mxu0 0.0
        %527 = vmatprep.subr.mxu0 0.0
        %528 = vmatpush1.xpose.msra.mxu0 0.0
        %529 = vmatprep.mubr.f32.mxu0 0.0
        %530 = vmatmul.mubr.f32.gmra.mrb[0].mxu0 %v463
        %v531 = vpop.f32.mrb[0].mxu0
        %v532 = vadd.f32 0.0, %v531
        %v533 = vpop.f32.mrb[0].mxu0
        %534 = vdwg.mxu0
        %v536 = vsel %vm380, %v459, 0
        %538 = vmatprep.subr.mxu0 0.0
        %539 = vmatpush1.xpose.msra.mxu0 %v385
        %540 = vmatprep.subr.mxu0 0.0
        %541 = vmatpush1.xpose.msra.mxu0 0.0
        %542 = vmatprep.subr.mxu0 0.0
        %543 = vmatpush1.xpose.msra.mxu0 0.0
        %544 = vmatprep.subr.mxu0 0.0
        %545 = vmatpush1.xpose.msra.mxu0 0.0
        %546 = vmatprep.subr.mxu0 0.0
        %547 = vmatpush1.xpose.msra.mxu0 0.0
        %548 = vmatprep.subr.mxu0 0.0
        %549 = vmatpush1.xpose.msra.mxu0 0.0
        %550 = vmatprep.subr.mxu0 0.0
        %551 = vmatpush1.xpose.msra.mxu0 0.0
        %552 = vmatprep.subr.mxu0 0.0
        %553 = vmatpush1.xpose.msra.mxu0 0.0
        %554 = vmatprep.subr.mxu0 0.0
        %555 = vmatpush1.xpose.msra.mxu0 0.0
        %556 = vmatprep.subr.mxu0 0.0
        %557 = vmatpush1.xpose.msra.mxu0 0.0
        %558 = vmatprep.subr.mxu0 0.0
        %559 = vmatpush1.xpose.msra.mxu0 0.0
        %560 = vmatprep.subr.mxu0 0.0
        %561 = vmatpush1.xpose.msra.mxu0 0.0
        %562 = vmatprep.subr.mxu0 0.0
        %563 = vmatpush1.xpose.msra.mxu0 0.0
        %564 = vmatprep.subr.mxu0 0.0
        %565 = vmatpush1.xpose.msra.mxu0 0.0
        %566 = vmatprep.subr.mxu0 0.0
        %567 = vmatpush1.xpose.msra.mxu0 0.0
        %568 = vmatprep.subr.mxu0 0.0
        %569 = vmatpush1.xpose.msra.mxu0 0.0
        %570 = vmatprep.subr.mxu0 0.0
        %571 = vmatpush1.xpose.msra.mxu0 0.0
        %572 = vmatprep.subr.mxu0 0.0
        %573 = vmatpush1.xpose.msra.mxu0 0.0
        %574 = vmatprep.subr.mxu0 0.0
        %575 = vmatpush1.xpose.msra.mxu0 0.0
        %576 = vmatprep.subr.mxu0 0.0
        %577 = vmatpush1.xpose.msra.mxu0 0.0
        %578 = vmatprep.subr.mxu0 0.0
        %579 = vmatpush1.xpose.msra.mxu0 0.0
        %580 = vmatprep.subr.mxu0 0.0
        %581 = vmatpush1.xpose.msra.mxu0 0.0
        %582 = vmatprep.subr.mxu0 0.0
        %583 = vmatpush1.xpose.msra.mxu0 0.0
        %584 = vmatprep.subr.mxu0 0.0
        %585 = vmatpush1.xpose.msra.mxu0 0.0
        %586 = vmatprep.subr.mxu0 0.0
        %587 = vmatpush1.xpose.msra.mxu0 0.0
        %588 = vmatprep.subr.mxu0 0.0
        %589 = vmatpush1.xpose.msra.mxu0 0.0
        %590 = vmatprep.subr.mxu0 0.0
        %591 = vmatpush1.xpose.msra.mxu0 0.0
        %592 = vmatprep.subr.mxu0 0.0
        %593 = vmatpush1.xpose.msra.mxu0 0.0
        %594 = vmatprep.subr.mxu0 0.0
        %595 = vmatpush1.xpose.msra.mxu0 0.0
        %596 = vmatprep.subr.mxu0 0.0
        %597 = vmatpush1.xpose.msra.mxu0 0.0
        %598 = vmatprep.subr.mxu0 0.0
        %599 = vmatpush1.xpose.msra.mxu0 0.0
        %600 = vmatprep.subr.mxu0 0.0
        %601 = vmatpush1.xpose.msra.mxu0 0.0
        %602 = vmatprep.mubr.f32.mxu0 0.0
        %603 = vmatmul.mubr.f32.gmra.mrb[0].mxu0 %v536
        %v604 = vpop.f32.mrb[0].mxu0
        %v605 = vadd.f32 0.0, %v604
        %v606 = vpop.f32.mrb[0].mxu0
        %607 = vdwg.mxu0
        %v608 = vxor.u32 %v532, 2147483648
        %v609 = vxor.u32 %v605, 2147483648
        %v610 = vmul.f32 %v608, 1.442695
        %v611 = vpow.pop %v610
        %v612 = vmul.f32 %v609, 1.442695
        %v613 = vpow.pop %v612
        %v614 = vadd.f32 %v611, 1.0
        %v615 = vadd.f32 %v613, 1.0
        %v616 = vrcp.pop %v614
        %v617 = vmul.f32 1.0, %v616
        %v618 = vrcp.pop %v615
        %v619 = vmul.f32 1.0, %v618
        %vm620 = vcmask 64512
        %v622 = vsel %vm620, %v617, 0
        %624 = vmatprep.subr.mxu0 0.0
        %625 = vmatpush1.msra.mxu0 %v368
        %626 = vmatprep.subr.mxu0 0.0
        %627 = vmatpush1.msra.mxu0 0.0
        %628 = vmatprep.subr.mxu0 0.0
        %629 = vmatpush1.msra.mxu0 0.0
        %630 = vmatprep.subr.mxu0 0.0
        %631 = vmatpush1.msra.mxu0 0.0
        %632 = vmatprep.subr.mxu0 0.0
        %633 = vmatpush1.msra.mxu0 0.0
        %634 = vmatprep.subr.mxu0 0.0
        %635 = vmatpush1.msra.mxu0 0.0
        %636 = vmatprep.subr.mxu0 0.0
        %637 = vmatpush1.msra.mxu0 0.0
        %638 = vmatprep.subr.mxu0 0.0
        %639 = vmatpush1.msra.mxu0 0.0
        %640 = vmatprep.subr.mxu0 0.0
        %641 = vmatpush1.msra.mxu0 0.0
        %642 = vmatprep.subr.mxu0 0.0
        %643 = vmatpush1.msra.mxu0 0.0
        %644 = vmatprep.subr.mxu0 0.0
        %645 = vmatpush1.msra.mxu0 0.0
        %646 = vmatprep.subr.mxu0 0.0
        %647 = vmatpush1.msra.mxu0 0.0
        %648 = vmatprep.subr.mxu0 0.0
        %649 = vmatpush1.msra.mxu0 0.0
        %650 = vmatprep.subr.mxu0 0.0
        %651 = vmatpush1.msra.mxu0 0.0
        %652 = vmatprep.subr.mxu0 0.0
        %653 = vmatpush1.msra.mxu0 0.0
        %654 = vmatprep.subr.mxu0 0.0
        %655 = vmatpush1.msra.mxu0 0.0
        %656 = vmatprep.subr.mxu0 0.0
        %657 = vmatpush1.msra.mxu0 0.0
        %658 = vmatprep.subr.mxu0 0.0
        %659 = vmatpush1.msra.mxu0 0.0
        %660 = vmatprep.subr.mxu0 0.0
        %661 = vmatpush1.msra.mxu0 0.0
        %662 = vmatprep.subr.mxu0 0.0
        %663 = vmatpush1.msra.mxu0 0.0
        %664 = vmatprep.subr.mxu0 0.0
        %665 = vmatpush1.msra.mxu0 0.0
        %666 = vmatprep.subr.mxu0 0.0
        %667 = vmatpush1.msra.mxu0 0.0
        %668 = vmatprep.subr.mxu0 0.0
        %669 = vmatpush1.msra.mxu0 0.0
        %670 = vmatprep.subr.mxu0 0.0
        %671 = vmatpush1.msra.mxu0 0.0
        %672 = vmatprep.subr.mxu0 0.0
        %673 = vmatpush1.msra.mxu0 0.0
        %674 = vmatprep.subr.mxu0 0.0
        %675 = vmatpush1.msra.mxu0 0.0
        %676 = vmatprep.subr.mxu0 0.0
        %677 = vmatpush1.msra.mxu0 0.0
        %678 = vmatprep.subr.mxu0 0.0
        %679 = vmatpush1.msra.mxu0 0.0
        %680 = vmatprep.subr.mxu0 0.0
        %681 = vmatpush1.msra.mxu0 0.0
        %682 = vmatprep.subr.mxu0 0.0
        %683 = vmatpush1.msra.mxu0 0.0
        %684 = vmatprep.subr.mxu0 0.0
        %685 = vmatpush1.msra.mxu0 0.0
        %686 = vmatprep.subr.mxu0 0.0
        %687 = vmatpush1.msra.mxu0 0.0
        %688 = vmatprep.mubr.f32.mxu0 0.0
        %689 = vmatmul.mubr.f32.gmra.mrb[0].mxu0 %v622
        %v690 = vpop.f32.mrb[0].mxu0
        %v691 = vadd.f32 0.0, %v690
        %v692 = vpop.f32.mrb[0].mxu0
        %693 = vdwg.mxu0
        %v695 = vsel %vm620, %v619, 0
        %697 = vmatprep.subr.mxu0 0.0
        %698 = vmatpush1.msra.mxu0 %v373
        %699 = vmatprep.subr.mxu0 0.0
        %700 = vmatpush1.msra.mxu0 0.0
        %701 = vmatprep.subr.mxu0 0.0
        %702 = vmatpush1.msra.mxu0 0.0
        %703 = vmatprep.subr.mxu0 0.0
        %704 = vmatpush1.msra.mxu0 0.0
        %705 = vmatprep.subr.mxu0 0.0
        %706 = vmatpush1.msra.mxu0 0.0
        %707 = vmatprep.subr.mxu0 0.0
        %708 = vmatpush1.msra.mxu0 0.0
        %709 = vmatprep.subr.mxu0 0.0
        %710 = vmatpush1.msra.mxu0 0.0
        %711 = vmatprep.subr.mxu0 0.0
        %712 = vmatpush1.msra.mxu0 0.0
        %713 = vmatprep.subr.mxu0 0.0
        %714 = vmatpush1.msra.mxu0 0.0
        %715 = vmatprep.subr.mxu0 0.0
        %716 = vmatpush1.msra.mxu0 0.0
        %717 = vmatprep.subr.mxu0 0.0
        %718 = vmatpush1.msra.mxu0 0.0
        %719 = vmatprep.subr.mxu0 0.0
        %720 = vmatpush1.msra.mxu0 0.0
        %721 = vmatprep.subr.mxu0 0.0
        %722 = vmatpush1.msra.mxu0 0.0
        %723 = vmatprep.subr.mxu0 0.0
        %724 = vmatpush1.msra.mxu0 0.0
        %725 = vmatprep.subr.mxu0 0.0
        %726 = vmatpush1.msra.mxu0 0.0
        %727 = vmatprep.subr.mxu0 0.0
        %728 = vmatpush1.msra.mxu0 0.0
        %729 = vmatprep.subr.mxu0 0.0
        %730 = vmatpush1.msra.mxu0 0.0
        %731 = vmatprep.subr.mxu0 0.0
        %732 = vmatpush1.msra.mxu0 0.0
        %733 = vmatprep.subr.mxu0 0.0
        %734 = vmatpush1.msra.mxu0 0.0
        %735 = vmatprep.subr.mxu0 0.0
        %736 = vmatpush1.msra.mxu0 0.0
        %737 = vmatprep.subr.mxu0 0.0
        %738 = vmatpush1.msra.mxu0 0.0
        %739 = vmatprep.subr.mxu0 0.0
        %740 = vmatpush1.msra.mxu0 0.0
        %741 = vmatprep.subr.mxu0 0.0
        %742 = vmatpush1.msra.mxu0 0.0
        %743 = vmatprep.subr.mxu0 0.0
        %744 = vmatpush1.msra.mxu0 0.0
        %745 = vmatprep.subr.mxu0 0.0
        %746 = vmatpush1.msra.mxu0 0.0
        %747 = vmatprep.subr.mxu0 0.0
        %748 = vmatpush1.msra.mxu0 0.0
        %749 = vmatprep.subr.mxu0 0.0
        %750 = vmatpush1.msra.mxu0 0.0
        %751 = vmatprep.subr.mxu0 0.0
        %752 = vmatpush1.msra.mxu0 0.0
        %753 = vmatprep.subr.mxu0 0.0
        %754 = vmatpush1.msra.mxu0 0.0
        %755 = vmatprep.subr.mxu0 0.0
        %756 = vmatpush1.msra.mxu0 0.0
        %757 = vmatprep.subr.mxu0 0.0
        %758 = vmatpush1.msra.mxu0 0.0
        %759 = vmatprep.subr.mxu0 0.0
        %760 = vmatpush1.msra.mxu0 0.0
        %761 = vmatprep.mubr.f32.mxu0 0.0
        %762 = vmatmul.mubr.f32.gmra.mrb[0].mxu0 %v695
        %v763 = vpop.f32.mrb[0].mxu0
        %v764 = vadd.f32 0.0, %v763
        %v765 = vpop.f32.mrb[0].mxu0
        %766 = vdwg.mxu0
        %v767 = vmul.f32 %v691, 0.125
        %v768 = vmul.f32 %v764, 0.125
        %769 = vst.msk [vmem:[%s284] sm:$0xff] %vm294, %v767
        %770 = vst.msk [vmem:[%s284 + $0x8] sm:$0xff] %vm294, %v768
        %s771 = sand.u32 %s127, 1
        %s772 = scalar_lea.sflag [#allocation4], %s771
        %s773 = sand.u32 %s127, 1
        %s774 = smul.addr %s773, 16
        %s775 = scalar_lea.vmem [#allocation10], %s774
        // Predicated region
        $region53: #{tpu_custom_call.1} parent=35 // pred_check
          %p776 = pneg %p137
        $region54: #{tpu_custom_call.1} parent=35 // pred_check_branch
          %778 = sbr.rel (%p776) target = $region56
        $region55: #{tpu_custom_call.1} parent=35 // pred_region
          %s779 = smul.u32 2, %s25
          %s781 = ssub.s32 256, 256
          %782 = vsyncadd %s772, %s781
          %s783 = smul.addr %s779, 128
          %s784 = scalar_lea.hbm %s4, %s783
          %s785 = sshll.u32 %s775, 4
          %s786 = int_to_ptr.vmem [resolvable:$true] %s785
          %791 = dma.vmem_to_hbm [thread:$0]  %s786, 256, %s784, %s772, 128, 128, 8
        $region56: #{tpu_custom_call.1} parent=35 // pred_fallthru
          _
      $region36: #{tpu_custom_call.1} parent=5 // pred_fallthru
        _
      %p792 = scmp.le.s32.totalorder 2, %s20
      // Predicated region
      $region57: #{tpu_custom_call.1} parent=5 // pred_check
        %p793 = pneg %p792
      $region58: #{tpu_custom_call.1} parent=5 // pred_check_branch
        %795 = sbr.rel (%p793) target = $region60
      $region59: #{tpu_custom_call.1} parent=5 // pred_region
        %s796 = ssub.s32 %s20, 2
        // Predicated region
        $region61: #{tpu_custom_call.1} parent=59 // pred_check
          %p797 = pneg %p143
        $region62: #{tpu_custom_call.1} parent=59 // pred_check_branch
          %799 = sbr.rel (%p797) target = $region64
        $region63: #{tpu_custom_call.1} parent=59 // pred_region
          %s800 = sand.u32 %s128, 1
          %s801 = scalar_lea.sflag [#allocation4], %s800
          %s802 = sand.u32 %s128, 1
          %s803 = smul.addr %s802, 16
          %s804 = scalar_lea.vmem [#allocation10], %s803
          %805 = dma.done %s801, 256
        $region64: #{tpu_custom_call.1} parent=59 // pred_fallthru
          _
      $region60: #{tpu_custom_call.1} parent=5 // pred_fallthru
        _
    $region6: #{tpu_custom_call.1} parent=1 // loop_footer
      %s24 = sadd.s32 1, %s20
    $region7: #{tpu_custom_call.1} parent=1 // loop_footer_branch
      %19 = sbr.rel target = $region3
    $region8: #{tpu_custom_call.1} parent=1 // loop_exit
      _
    %806 = vsyncpa [#allocation3], 1
    %s807 = scalar_lea.sflag [#allocation3], 1
    %808 = vsyncpa %s807, 1
    %809 = vsyncpa [#allocation6], 1
    %s810 = scalar_lea.sflag [#allocation6], 1
    %811 = vsyncpa %s810, 1
    %812 = vsyncpa [#allocation9], 1
    %813 = vsyncpa [#allocation4], 1
    %s814 = scalar_lea.sflag [#allocation4], 1
    %815 = vsyncpa %s814, 1

</llo_original>
